<compile_context>
chip_gen: v5e
topology: v5e:2x2
jax: 0.10.0
libtpu: 0.0.40
codegen_flags: <defaults>
</compile_context>

<pallas_src>
import math

import jax
import jax.numpy as jnp
from jax.experimental import pallas as pl
from jax.experimental.pallas import tpu as pltpu

SMOOTH = 1e-6
USE_DICE = False          # matches Loss() defaults
_LOG_CLAMP = -100.0       # torch BCELoss clamps log outputs at -100
# f32 sigmoid(x) rounds to exactly 1.0 once x >= 25*ln(2); torch then evaluates
# log(1 - 1.0) = -inf and clamps it to -100.  Reproduce that quirk exactly.
_SAT_LOGIT = 25.0 * math.log(2.0)
_NEUTRAL_LOGIT = -200.0   # p = 0 and bce = 0 (with t = 0): padding is a no-op


def _cdiv(a, b):
    return -(-a // b)


def _round_up(x, m):
    return ((x + m - 1) // m) * m


def _make_kernel(h_total, h_blk, h_padded):
    """Kernel over one (ncb, h_blk, W) tile of logits / targets."""

    def kernel(pred_ref, tgt_ref, bce_ref, spt_ref, pt_ref):
        x = pred_ref[...].astype(jnp.float32)          # (ncb, h_blk, W)
        t = tgt_ref[...].astype(jnp.float32)

        if h_padded:
            # Only the last H block can run past H.  Out-of-range sub-rows get a
            # hugely negative logit and a zero target, making every contribution
            # (p, p*t, bce, p+t) exactly zero -- no mask multiplies on the sums.
            h_ids = (pl.program_id(1) * h_blk
                     + jax.lax.broadcasted_iota(jnp.int32, (1, h_blk, 1), 1))
            valid = h_ids < h_total
            x = jnp.where(valid, x, _NEUTRAL_LOGIT)
            t = jnp.where(valid, t, 0.0)

        # Stable BCE-with-logits via one softplus:
        #   softplus(x) = relu(x) + log(1 + exp(-|x|))
        #   log(p) = x - softplus(x),  log(1-p) = -softplus(x),  p = sigmoid(x)
        e = jnp.exp(-jnp.abs(x))                       # EUP
        softplus = jnp.maximum(x, 0.0) + jnp.log(1.0 + e)   # EUP
        inv = 1.0 / (1.0 + e)                          # EUP (reciprocal)
        p = jnp.where(x >= 0.0, inv, e * inv)          # == sigmoid(x), exact divide

        log_p = jnp.maximum(x - softplus, _LOG_CLAMP)
        log_1mp = jnp.where(x >= _SAT_LOGIT, _LOG_CLAMP, -softplus)

        bce = -(log_1mp + t * (log_p - log_1mp))       # == -(t*logp + (1-t)*log1mp)

        def row_sums(v):                               # (ncb, h_blk, W) -> (ncb, 1)
            return jnp.sum(jnp.sum(v, axis=2), axis=1, keepdims=True)

        # One small store per output per block (no per-step accumulators).
        bce_ref[...] = row_sums(bce).reshape(1, 1, -1, 1)
        spt_ref[...] = row_sums(p + t).reshape(1, 1, -1, 1)
        pt_ref[...] = row_sums(p * t).reshape(1, 1, -1, 1)

    return kernel


def segmentation_loss(predictions, targets, *, smooth=SMOOTH, use_dice=USE_DICE,
                      block_budget_bytes=None):
    """predictions, targets: (N, C, H, W).  Returns the scalar f32 loss."""
    assert predictions.shape == targets.shape
    N, C, H, W = predictions.shape
    NC = N * C

    # ---- VMEM budget: f32 compute footprint + explicit scoped-VMEM limit. ----
    try:
        vmem_cap = int(pltpu.get_tpu_info().vmem_capacity_bytes)
    except Exception:                      # fall back to the smallest (v7x) size
        vmem_cap = 64 * 1024 * 1024
    vmem_limit = min((vmem_cap * 3) // 4, 64 * 1024 * 1024)
    if block_budget_bytes is None:
        # 2 inputs x 2 pipeline buffers + a handful of full-block f32 temporaries.
        block_budget_bytes = min(6 * 1024 * 1024,
                                 max(1 * 1024 * 1024,
                                     (vmem_limit - 4 * 1024 * 1024) // 12))

    # ---- Tiling: blocks are (ncb, h_blk, W); W is never split, so the last
    #      block dim always equals the full array dim (legal for any W). ----
    img_f32 = H * W * 4
    if img_f32 <= block_budget_bytes or H <= 8:
        h_blk, n_h = H, 1
        ncb = min(NC, max(1, block_budget_bytes // max(img_f32, 1)))
    else:
        h_blk = max(8, ((block_budget_bytes // (W * 4)) // 8) * 8)
        n_h = _cdiv(H, h_blk)
        h_blk = _round_up(_cdiv(H, n_h), 8)          # balanced -> minimal padding
        n_h = _cdiv(H, h_blk)
        ncb = 1
    n_ncb = _cdiv(NC, ncb)

    # Keep both v7x TensorCores busy and give the pipeline a few steps to overlap
    # DMA with compute, even when N*C is small (parallel axis must not collapse).
    if n_ncb * n_h < 4:
        if NC > 1:
            n_ncb = min(NC, max(n_ncb, _cdiv(4, n_h)))
            ncb = _cdiv(NC, n_ncb)
            n_ncb = _cdiv(NC, ncb)
        elif H >= 16 and n_h == 1:
            n_h = 2
            h_blk = _round_up(_cdiv(H, n_h), 8)
            n_h = _cdiv(H, h_blk)

    h_padded = (n_h * h_blk != H)
    nc_pad = n_ncb * ncb

    # Free, layout-preserving view: only the two major dims are merged.
    pred3 = predictions.reshape(NC, H, W)
    tgt3 = targets.reshape(NC, H, W)

    in_spec = pl.BlockSpec((ncb, h_blk, W), lambda i, j: (i, j, 0))
    out_spec = pl.BlockSpec((1, 1, ncb, 1), lambda i, j: (i, j, 0, 0))
    out_sds = jax.ShapeDtypeStruct((n_ncb, n_h, ncb, 1), jnp.float32)

    bce_part, spt_part, pt_part = pl.pallas_call(
        _make_kernel(H, h_blk, h_padded),
        out_shape=(out_sds, out_sds, out_sds),
        grid_spec=pltpu.PrefetchScalarGridSpec(
            num_scalar_prefetch=0,
            grid=(n_ncb, n_h),
            in_specs=[in_spec, in_spec],
            out_specs=(out_spec, out_spec, out_spec),
        ),
        compiler_params=pltpu.CompilerParams(
            dimension_semantics=("parallel", "parallel"),
            vmem_limit_bytes=int(vmem_limit),
        ),
    )(pred3, tgt3)

    # ---- Tiny finalize in JAX (a few N*C scalars). ----
    def fold_rows(part):                       # (n_ncb, n_h, ncb, 1) -> (NC,)
        v = jnp.swapaxes(part[..., 0], 1, 2)   # (n_ncb, ncb, n_h)
        v = v.reshape(nc_pad, n_h)
        return jnp.sum(v, axis=1)[:NC]         # junk tail rows sliced off here

    bce_rows = fold_rows(bce_part)             # sum(bce)   per (n, c)
    spt_rows = fold_rows(spt_part)             # sum(p + t) per (n, c)
    pt_rows = fold_rows(pt_part)               # sum(p * t) per (n, c)

    pixel_loss = jnp.sum(bce_rows) / float(N * C * H * W)
    inter = pt_rows + smooth
    summ = spt_rows + smooth
    if use_dice:
        metric = 2.0 * inter / summ
    else:
        # NOTE: for an (n,c) slice with ~zero predicted and target mass the IoU can
        # blow up; this matches the torch reference exactly (not a kernel issue).
        metric = inter / (summ - inter)
    return (1.0 - jnp.mean(metric)) + pixel_loss


def _reference_loss(predictions, targets, smooth=SMOOTH, use_dice=USE_DICE):
    """Pure-JAX mirror of the torch module (sigmoid + BCELoss + 1 - IoU)."""
    p = jax.nn.sigmoid(predictions.astype(jnp.float32))
    t = targets.astype(jnp.float32)
    bce = -(t * jnp.maximum(jnp.log(p), _LOG_CLAMP)
            + (1.0 - t) * jnp.maximum(jnp.log(1.0 - p), _LOG_CLAMP))
    pixel_loss = jnp.mean(bce)
    inter = jnp.sum(p * t, axis=(2, 3)) + smooth
    summ = jnp.sum(p, axis=(2, 3)) + jnp.sum(t, axis=(2, 3)) + smooth
    if use_dice:
        metric = 2.0 * inter / summ
    else:
        metric = inter / (summ - inter)
    return (1.0 - jnp.mean(metric)) + pixel_loss


if __name__ == "__main__":
    key = jax.random.PRNGKey(0)
    cases = [
        dict(shape=(2, 4, 16, 16)),                            # aligned, whole-image blocks
        dict(shape=(2, 3, 10, 13)),                            # odd H/W, full-dim blocks
        dict(shape=(3, 7, 16, 32)),                            # partial last N*C block
        dict(shape=(1, 2, 28, 40), block_budget_bytes=2048),   # split + padded H blocks
    ]
    for case in cases:
        shape = case["shape"]
        key, k1, k2 = jax.random.split(key, 3)
        logits = jax.random.normal(k1, shape, dtype=jnp.float32)
        tgts = jax.random.uniform(k2, shape, dtype=jnp.float32)
        out = jax.block_until_ready(
            segmentation_loss(logits, tgts,
                              block_budget_bytes=case.get("block_budget_bytes")))
        ref = jax.block_until_ready(_reference_loss(logits, tgts))
        assert jnp.allclose(out, ref, rtol=1e-5, atol=1e-5), (shape, out, ref)
    print("KERNEL_OK")
</pallas_src>

<mosaic_0001>
module attributes {stable_mosaic.version = 11 : i64} {
  func.func @kernel(%arg0: i32, %arg1: i32, %arg2: memref<2x16x16xf32, #tpu.memory_space<vmem>>, %arg3: memref<2x16x16xf32, #tpu.memory_space<vmem>>, %arg4: memref<1x1x2x1xf32, #tpu.memory_space<vmem>>, %arg5: memref<1x1x2x1xf32, #tpu.memory_space<vmem>>, %arg6: memref<1x1x2x1xf32, #tpu.memory_space<vmem>>) attributes {dimension_semantics = [#tpu.dimension_semantics<parallel>, #tpu.dimension_semantics<parallel>], iteration_bounds = array<i64: 4, 1>, scalar_prefetch = 0 : i64, scratch_operands = 0 : i64, tpu.core_type = #tpu.core_type<tc>, window_params = [{transform_indices = @transform_0, window_bounds = array<i64: 2, 16, 16>}, {transform_indices = @transform_1, window_bounds = array<i64: 2, 16, 16>}, {transform_indices = @transform_2, window_bounds = array<i64: 1, 1, 2, 1>}, {transform_indices = @transform_3, window_bounds = array<i64: 1, 1, 2, 1>}, {transform_indices = @transform_4, window_bounds = array<i64: 1, 1, 2, 1>}]} {
    %c0 = arith.constant 0 : index
    %c0_0 = arith.constant 0 : index
    %c0_1 = arith.constant 0 : index
    %0 = vector.load %arg2[%c0, %c0_0, %c0_1] : memref<2x16x16xf32, #tpu.memory_space<vmem>>, vector<2x16x16xf32>
    %c0_2 = arith.constant 0 : index
    %c0_3 = arith.constant 0 : index
    %c0_4 = arith.constant 0 : index
    %1 = vector.load %arg3[%c0_2, %c0_3, %c0_4] : memref<2x16x16xf32, #tpu.memory_space<vmem>>, vector<2x16x16xf32>
    %2 = math.absf %0 : vector<2x16x16xf32>
    %cst = arith.constant 0.000000e+00 : f32
    %3 = vector.broadcast %cst : f32 to vector<2x16x16xf32>
    %4 = arith.subf %3, %2 : vector<2x16x16xf32>
    %5 = math.exp %4 : vector<2x16x16xf32>
    %cst_5 = arith.constant 0.000000e+00 : f32
    %6 = vector.broadcast %cst_5 : f32 to vector<2x16x16xf32>
    %7 = arith.maximumf %0, %6 : vector<2x16x16xf32>
    %cst_6 = arith.constant 1.000000e+00 : f32
    %8 = vector.broadcast %cst_6 : f32 to vector<2x16x16xf32>
    %9 = arith.addf %8, %5 : vector<2x16x16xf32>
    %10 = math.log %9 : vector<2x16x16xf32>
    %11 = arith.addf %7, %10 : vector<2x16x16xf32>
    %cst_7 = arith.constant 1.000000e+00 : f32
    %12 = vector.broadcast %cst_7 : f32 to vector<2x16x16xf32>
    %13 = arith.addf %12, %5 : vector<2x16x16xf32>
    %cst_8 = arith.constant 1.000000e+00 : f32
    %14 = vector.broadcast %cst_8 : f32 to vector<2x16x16xf32>
    %15 = arith.divf %14, %13 : vector<2x16x16xf32>
    %cst_9 = arith.constant 0.000000e+00 : f32
    %16 = vector.broadcast %cst_9 : f32 to vector<2x16x16xf32>
    %17 = arith.cmpf oge, %0, %16 : vector<2x16x16xf32>
    %18 = arith.mulf %5, %15 : vector<2x16x16xf32>
    %19 = arith.select %17, %15, %18 : vector<2x16x16xi1>, vector<2x16x16xf32>
    %20 = arith.subf %0, %11 : vector<2x16x16xf32>
    %cst_10 = arith.constant -1.000000e+02 : f32
    %21 = vector.broadcast %cst_10 : f32 to vector<2x16x16xf32>
    %22 = arith.maximumf %20, %21 : vector<2x16x16xf32>
    %cst_11 = arith.constant 17.32868 : f32
    %23 = vector.broadcast %cst_11 : f32 to vector<2x16x16xf32>
    %24 = arith.cmpf oge, %0, %23 : vector<2x16x16xf32>
    %cst_12 = arith.constant 0.000000e+00 : f32
    %25 = vector.broadcast %cst_12 : f32 to vector<2x16x16xf32>
    %26 = arith.subf %25, %11 : vector<2x16x16xf32>
    %cst_13 = arith.constant -1.000000e+02 : f32
    %27 = vector.broadcast %cst_13 : f32 to vector<2x16x16xf32>
    %28 = arith.select %24, %27, %26 : vector<2x16x16xi1>, vector<2x16x16xf32>
    %29 = arith.subf %22, %28 : vector<2x16x16xf32>
    %30 = arith.mulf %1, %29 : vector<2x16x16xf32>
    %31 = arith.addf %28, %30 : vector<2x16x16xf32>
    %cst_14 = arith.constant 0.000000e+00 : f32
    %32 = vector.broadcast %cst_14 : f32 to vector<2x16x16xf32>
    %33 = arith.subf %32, %31 : vector<2x16x16xf32>
    %cst_15 = arith.constant dense<0.000000e+00> : vector<2x16xf32>
    %34 = vector.multi_reduction <add>, %33, %cst_15 [2] : vector<2x16x16xf32> to vector<2x16xf32>
    %cst_16 = arith.constant dense<0.000000e+00> : vector<2xf32>
    %35 = vector.multi_reduction <add>, %34, %cst_16 [1] : vector<2x16xf32> to vector<2xf32>
    %36 = vector.shape_cast %35 : vector<2xf32> to vector<2x1xf32>
    %37 = vector.shape_cast %36 : vector<2x1xf32> to vector<1x1x2x1xf32>
    %c0_17 = arith.constant 0 : index
    %c0_18 = arith.constant 0 : index
    %c0_19 = arith.constant 0 : index
    %c0_20 = arith.constant 0 : index
    %38 = vector.load %arg4[%c0_17, %c0_18, %c0_19, %c0_20] : memref<1x1x2x1xf32, #tpu.memory_space<vmem>>, vector<1x1x2x1xf32>
    tpu.vector_store %arg4[%c0_17, %c0_18, %c0_19, %c0_20], %37 {strides = array<i32>} : memref<1x1x2x1xf32, #tpu.memory_space<vmem>>, vector<1x1x2x1xf32>,
    %39 = arith.addf %19, %1 : vector<2x16x16xf32>
    %cst_21 = arith.constant dense<0.000000e+00> : vector<2x16xf32>
    %40 = vector.multi_reduction <add>, %39, %cst_21 [2] : vector<2x16x16xf32> to vector<2x16xf32>
    %cst_22 = arith.constant dense<0.000000e+00> : vector<2xf32>
    %41 = vector.multi_reduction <add>, %40, %cst_22 [1] : vector<2x16xf32> to vector<2xf32>
    %42 = vector.shape_cast %41 : vector<2xf32> to vector<2x1xf32>
    %43 = vector.shape_cast %42 : vector<2x1xf32> to vector<1x1x2x1xf32>
    %c0_23 = arith.constant 0 : index
    %c0_24 = arith.constant 0 : index
    %c0_25 = arith.constant 0 : index
    %c0_26 = arith.constant 0 : index
    %44 = vector.load %arg5[%c0_23, %c0_24, %c0_25, %c0_26] : memref<1x1x2x1xf32, #tpu.memory_space<vmem>>, vector<1x1x2x1xf32>
    tpu.vector_store %arg5[%c0_23, %c0_24, %c0_25, %c0_26], %43 {strides = array<i32>} : memref<1x1x2x1xf32, #tpu.memory_space<vmem>>, vector<1x1x2x1xf32>,
    %45 = arith.mulf %19, %1 : vector<2x16x16xf32>
    %cst_27 = arith.constant dense<0.000000e+00> : vector<2x16xf32>
    %46 = vector.multi_reduction <add>, %45, %cst_27 [2] : vector<2x16x16xf32> to vector<2x16xf32>
    %cst_28 = arith.constant dense<0.000000e+00> : vector<2xf32>
    %47 = vector.multi_reduction <add>, %46, %cst_28 [1] : vector<2x16xf32> to vector<2xf32>
    %48 = vector.shape_cast %47 : vector<2xf32> to vector<2x1xf32>
    %49 = vector.shape_cast %48 : vector<2x1xf32> to vector<1x1x2x1xf32>
    %c0_29 = arith.constant 0 : index
    %c0_30 = arith.constant 0 : index
    %c0_31 = arith.constant 0 : index
    %c0_32 = arith.constant 0 : index
    %50 = vector.load %arg6[%c0_29, %c0_30, %c0_31, %c0_32] : memref<1x1x2x1xf32, #tpu.memory_space<vmem>>, vector<1x1x2x1xf32>
    tpu.vector_store %arg6[%c0_29, %c0_30, %c0_31, %c0_32], %49 {strides = array<i32>} : memref<1x1x2x1xf32, #tpu.memory_space<vmem>>, vector<1x1x2x1xf32>,
    return
  }
  func.func @transform_0(%arg0: i32, %arg1: i32) -> (i32, i32, i32) {
    %c0_i32 = arith.constant 0 : i32
    %c0_i32_0 = arith.constant 0 : i32
    return %arg0, %arg1, %c0_i32 : i32, i32, i32
  }
  func.func @transform_1(%arg0: i32, %arg1: i32) -> (i32, i32, i32) {
    %c0_i32 = arith.constant 0 : i32
    %c0_i32_0 = arith.constant 0 : i32
    return %arg0, %arg1, %c0_i32 : i32, i32, i32
  }
  func.func @transform_2(%arg0: i32, %arg1: i32) -> (i32, i32, i32, i32) {
    %c0_i32 = arith.constant 0 : i32
    %c0_i32_0 = arith.constant 0 : i32
    %c0_i32_1 = arith.constant 0 : i32
    return %arg0, %arg1, %c0_i32, %c0_i32_0 : i32, i32, i32, i32
  }
  func.func @transform_3(%arg0: i32, %arg1: i32) -> (i32, i32, i32, i32) {
    %c0_i32 = arith.constant 0 : i32
    %c0_i32_0 = arith.constant 0 : i32
    %c0_i32_1 = arith.constant 0 : i32
    return %arg0, %arg1, %c0_i32, %c0_i32_0 : i32, i32, i32, i32
  }
  func.func @transform_4(%arg0: i32, %arg1: i32) -> (i32, i32, i32, i32) {
    %c0_i32 = arith.constant 0 : i32
    %c0_i32_0 = arith.constant 0 : i32
    %c0_i32_1 = arith.constant 0 : i32
    return %arg0, %arg1, %c0_i32, %c0_i32_0 : i32, i32, i32, i32
  }
}

</mosaic_0001>

<llo_original>
// kernel: tpu_custom_call.1
$region0: #{tpu_custom_call.1}
  #allocation0 [shape = 'u32[]', space=smem, size = 0x4, offset = 0x4, fixed_abs, tag = 'smem constant byte address 0x4 - core index']
  #allocation1 [shape = 'u32[72,128]{1,0:T(1,128)}', space=vmem, size = 0x9000, scoped, tag = 'internal scratch']
  %s0 = inlined_call_operand.hbm [shape: f32[8,16,16], index: 0, kind: input, shape index: {}]
  %s1 = inlined_call_operand.hbm [shape: f32[8,16,16], index: 1, kind: input, shape index: {}]
  %s2 = inlined_call_operand.vmem [shape: f32[4,1,2,1], index: 2, kind: output, shape index: {0}]
  %s3 = inlined_call_operand.vmem [shape: f32[4,1,2,1], index: 3, kind: output, shape index: {1}]
  %s4 = inlined_call_operand.vmem [shape: f32[4,1,2,1], index: 4, kind: output, shape index: {2}]
  %5 = xla_tuple %s2, %s3, %s4
  %s6 = sld [smem:[#allocation0]]
  $region65: #{tpu_custom_call.1} parent=0
    _
  %s8 = ssub.s32 1, %s6
  %s9 = scalar_select 0, %s8, %s6
  $region1: #{tpu_custom_call.1} parent=0
    #allocation2 [shape = 'u8[32768]{0}', space=vmem, size = 0x8000, scoped, tag = 'input window, operand 0']
    #allocation3 [shape = 's32[2]{0}', space=sflag, size = 0x8, scoped, tag = 'scoped memory for tpu_custom_call.1']
    #allocation4 [shape = 'u8[32768]{0}', space=vmem, size = 0x8000, scoped, tag = 'input window, operand 1']
    #allocation5 [shape = 's32[2]{0}', space=sflag, size = 0x8, scoped, tag = 'scoped memory for tpu_custom_call.1']
    %10 = vsyncpa [#allocation3], 0
    %s11 = scalar_lea.sflag [#allocation3], 1
    %12 = vsyncpa %s11, 0
    %13 = vsyncpa [#allocation5], 0
    %s14 = scalar_lea.sflag [#allocation5], 1
    %15 = vsyncpa %s14, 0
    loop: start=0, step=1, limit=6
    $region2: #{tpu_custom_call.1} parent=1 // loop_pre_header
      _
    $region3: #{tpu_custom_call.1} parent=1 // loop_header
      %s17 = sphi 0, %s21
      %p18 = scmp.ge.s32.totalorder %s17, 6
      %s24 = sphi 0, %s36
      %s25 = sphi 0, %s32
      %s26 = sphi 0, %s24
      %s27 = sphi 0, %s25
      %s28 = sphi 0, %s26
      %s29 = sphi 0, %s27
      %s41 = sphi 0, %s43
      %s44 = sphi 0, %s41
      %s45 = sphi 0, %s44
      %s61 = sphi 0, %s45
      %s69 = sphi 0, %s71
      %s72 = sphi 0, %s69
      %s73 = sphi 0, %s72
      %s89 = sphi 0, %s73
      %s97 = sphi 0, %s99
      %s100 = sphi 0, %s97
      %s101 = sphi 0, %s100
      %s117 = sphi 0, %s101
      %s125 = sphi 0, %s127
      %s128 = sphi 0, %s125
      %s129 = sphi 0, %s128
      %s145 = sphi 0, %s129
      %s153 = sphi 0, %s155
      %s156 = sphi 0, %s153
      %s157 = sphi 0, %s156
      %s173 = sphi 0, %s157
    $region4: #{tpu_custom_call.1} parent=1 // loop_header_branch
      %20 = sbr.rel (%p18) target = $region8
    $region5: #{tpu_custom_call.1} parent=1 // loop_body
      %s22 = ssub.s32 %s17, 1
      %s23 = ssub.s32 %s17, 2
      %s30 = sadd.s32 1, %s25
      %p31 = scmp.ge.s32.totalorder %s30, 1
      %s32 = scalar_select %p31, 0, %s30
      %s33 = sadd.s32 1, %s24
      %s34 = scalar_select %p31, %s33, %s24
      %p35 = scmp.ge.s32.totalorder %s34, 4
      %s36 = scalar_select %p35, 0, %s34
      %s37 = ssub.s32 %s24, %s36
      %s38 = ssub.s32 %s25, %s32
      %s39 = sor.u32 %s37, %s38
      %p40 = scmp.eq.s32.totalorder %s39, 0
      %s42 = sadd.s32 %s41, 1
      %s43 = scalar_select %p40, %s41, %s42
      %p46 = pneg %p40
      %p47 = scmp.eq.s32.totalorder %s17, 3
      %p48 = por %p46, %p47
      %p49 = scmp.ne.s32.totalorder %s41, %s44
      %p50 = scmp.eq.s32.totalorder %s17, 0
      %p51 = por %p49, %p50
      %p52 = scmp.ne.s32.totalorder %s41, %s44
      %p53 = scmp.eq.s32.totalorder %s22, 3
      %p54 = por %p52, %p53
      %p55 = scmp.ne.s32.totalorder %s44, %s45
      %p56 = scmp.eq.s32.totalorder %s22, 0
      %p57 = por %p55, %p56
      %p58 = scmp.ne.s32.totalorder %s44, %s45
      %p59 = scmp.eq.s32.totalorder %s23, 3
      %p60 = por %p58, %p59
      %p62 = scmp.ne.s32.totalorder %s45, %s61
      %p63 = scmp.eq.s32.totalorder %s23, 0
      %p64 = por %p62, %p63
      %s65 = ssub.s32 %s24, %s36
      %s66 = ssub.s32 %s25, %s32
      %s67 = sor.u32 %s65, %s66
      %p68 = scmp.eq.s32.totalorder %s67, 0
      %s70 = sadd.s32 %s69, 1
      %s71 = scalar_select %p68, %s69, %s70
      %p74 = pneg %p68
      %p75 = scmp.eq.s32.totalorder %s17, 3
      %p76 = por %p74, %p75
      %p77 = scmp.ne.s32.totalorder %s69, %s72
      %p78 = scmp.eq.s32.totalorder %s17, 0
      %p79 = por %p77, %p78
      %p80 = scmp.ne.s32.totalorder %s69, %s72
      %p81 = scmp.eq.s32.totalorder %s22, 3
      %p82 = por %p80, %p81
      %p83 = scmp.ne.s32.totalorder %s72, %s73
      %p84 = scmp.eq.s32.totalorder %s22, 0
      %p85 = por %p83, %p84
      %p86 = scmp.ne.s32.totalorder %s72, %s73
      %p87 = scmp.eq.s32.totalorder %s23, 3
      %p88 = por %p86, %p87
      %p90 = scmp.ne.s32.totalorder %s73, %s89
      %p91 = scmp.eq.s32.totalorder %s23, 0
      %p92 = por %p90, %p91
      %s93 = ssub.s32 %s24, %s36
      %s94 = ssub.s32 %s25, %s32
      %s95 = sor.u32 %s93, %s94
      %p96 = scmp.eq.s32.totalorder %s95, 0
      %s98 = sadd.s32 %s97, 1
      %s99 = scalar_select %p96, %s97, %s98
      %p102 = pneg %p96
      %p103 = scmp.eq.s32.totalorder %s17, 3
      %p104 = por %p102, %p103
      %p105 = scmp.ne.s32.totalorder %s97, %s100
      %p106 = scmp.eq.s32.totalorder %s17, 0
      %p107 = por %p105, %p106
      %p108 = scmp.ne.s32.totalorder %s97, %s100
      %p109 = scmp.eq.s32.totalorder %s22, 3
      %p110 = por %p108, %p109
      %p111 = scmp.ne.s32.totalorder %s100, %s101
      %p112 = scmp.eq.s32.totalorder %s22, 0
      %p113 = por %p111, %p112
      %p114 = scmp.ne.s32.totalorder %s100, %s101
      %p115 = scmp.eq.s32.totalorder %s23, 3
      %p116 = por %p114, %p115
      %p118 = scmp.ne.s32.totalorder %s101, %s117
      %p119 = scmp.eq.s32.totalorder %s23, 0
      %p120 = por %p118, %p119
      %s121 = ssub.s32 %s24, %s36
      %s122 = ssub.s32 %s25, %s32
      %s123 = sor.u32 %s121, %s122
      %p124 = scmp.eq.s32.totalorder %s123, 0
      %s126 = sadd.s32 %s125, 1
      %s127 = scalar_select %p124, %s125, %s126
      %p130 = pneg %p124
      %p131 = scmp.eq.s32.totalorder %s17, 3
      %p132 = por %p130, %p131
      %p133 = scmp.ne.s32.totalorder %s125, %s128
      %p134 = scmp.eq.s32.totalorder %s17, 0
      %p135 = por %p133, %p134
      %p136 = scmp.ne.s32.totalorder %s125, %s128
      %p137 = scmp.eq.s32.totalorder %s22, 3
      %p138 = por %p136, %p137
      %p139 = scmp.ne.s32.totalorder %s128, %s129
      %p140 = scmp.eq.s32.totalorder %s22, 0
      %p141 = por %p139, %p140
      %p142 = scmp.ne.s32.totalorder %s128, %s129
      %p143 = scmp.eq.s32.totalorder %s23, 3
      %p144 = por %p142, %p143
      %p146 = scmp.ne.s32.totalorder %s129, %s145
      %p147 = scmp.eq.s32.totalorder %s23, 0
      %p148 = por %p146, %p147
      %s149 = ssub.s32 %s24, %s36
      %s150 = ssub.s32 %s25, %s32
      %s151 = sor.u32 %s149, %s150
      %p152 = scmp.eq.s32.totalorder %s151, 0
      %s154 = sadd.s32 %s153, 1
      %s155 = scalar_select %p152, %s153, %s154
      %p158 = pneg %p152
      %p159 = scmp.eq.s32.totalorder %s17, 3
      %p160 = por %p158, %p159
      %p161 = scmp.ne.s32.totalorder %s153, %s156
      %p162 = scmp.eq.s32.totalorder %s17, 0
      %p163 = por %p161, %p162
      %p164 = scmp.ne.s32.totalorder %s153, %s156
      %p165 = scmp.eq.s32.totalorder %s22, 3
      %p166 = por %p164, %p165
      %p167 = scmp.ne.s32.totalorder %s156, %s157
      %p168 = scmp.eq.s32.totalorder %s22, 0
      %p169 = por %p167, %p168
      %p170 = scmp.ne.s32.totalorder %s156, %s157
      %p171 = scmp.eq.s32.totalorder %s23, 3
      %p172 = por %p170, %p171
      %p174 = scmp.ne.s32.totalorder %s157, %s173
      %p175 = scmp.eq.s32.totalorder %s23, 0
      %p176 = por %p174, %p175
      %p177 = scmp.le.s32.totalorder 1, %s17
      %p178 = scmp.lt.s32.totalorder %s17, 5
      %p179 = pnand %p177, %p178
      %p180 = pneg %p179
      // Predicated region
      $region9: #{tpu_custom_call.1} parent=5 // pred_check
        _
      $region10: #{tpu_custom_call.1} parent=5 // pred_check_branch
        %182 = sbr.rel (%p179) target = $region12
      $region11: #{tpu_custom_call.1} parent=5 // pred_region
        %s183 = ssub.s32 %s17, 1
      $region12: #{tpu_custom_call.1} parent=5 // pred_fallthru
        _
      %p184 = scmp.lt.s32.totalorder %s17, 4
      // Predicated region
      $region13: #{tpu_custom_call.1} parent=5 // pred_check
        %p185 = pneg %p184
      $region14: #{tpu_custom_call.1} parent=5 // pred_check_branch
        %187 = sbr.rel (%p185) target = $region16
      $region15: #{tpu_custom_call.1} parent=5 // pred_region
        // Predicated region
        $region17: #{tpu_custom_call.1} parent=15 // pred_check
          %p188 = pneg %p51
        $region18: #{tpu_custom_call.1} parent=15 // pred_check_branch
          %190 = sbr.rel (%p188) target = $region20
        $region19: #{tpu_custom_call.1} parent=15 // pred_region
          %s191 = sand.u32 %s41, 1
          %s192 = scalar_lea.sflag [#allocation3], %s191
          %s193 = sand.u32 %s41, 1
          %s194 = smul.addr %s193, 32
          %s195 = scalar_lea.vmem [#allocation2], %s194
          %s196 = smul.u32 2, %s24
          %s197 = smul.u32 2, %s25
          %199 = vsyncadd %s192, 0
          %s200 = smul.addr %s196, 2
          %s201 = sadd.s32 %s197, %s200
          %s202 = smul.addr %s201, 8
          %s203 = scalar_lea.hbm %s0, %s202
          %s204 = sshll.u32 %s203, 4
          %s205 = int_to_ptr.hbm [resolvable:$true] %s204
          %s206 = sshll.u32 %s195, 4
          %s207 = int_to_ptr.vmem [resolvable:$true] %s206
          %212 = dma.hbm_to_vmem [thread:$0]  %s205, 512, %s207, %s192, 128, 128, 8
        $region20: #{tpu_custom_call.1} parent=15 // pred_fallthru
          _
        // Predicated region
        $region21: #{tpu_custom_call.1} parent=15 // pred_check
          %p213 = pneg %p79
        $region22: #{tpu_custom_call.1} parent=15 // pred_check_branch
          %215 = sbr.rel (%p213) target = $region24
        $region23: #{tpu_custom_call.1} parent=15 // pred_region
          %s216 = sand.u32 %s69, 1
          %s217 = scalar_lea.sflag [#allocation5], %s216
          %s218 = sand.u32 %s69, 1
          %s219 = smul.addr %s218, 32
          %s220 = scalar_lea.vmem [#allocation4], %s219
          %s221 = smul.u32 2, %s24
          %s222 = smul.u32 2, %s25
          %224 = vsyncadd %s217, 0
          %s225 = smul.addr %s221, 2
          %s226 = sadd.s32 %s222, %s225
          %s227 = smul.addr %s226, 8
          %s228 = scalar_lea.hbm %s1, %s227
          %s229 = sshll.u32 %s228, 4
          %s230 = int_to_ptr.hbm [resolvable:$true] %s229
          %s231 = sshll.u32 %s220, 4
          %s232 = int_to_ptr.vmem [resolvable:$true] %s231
          %237 = dma.hbm_to_vmem [thread:$0]  %s230, 512, %s232, %s217, 128, 128, 8
        $region24: #{tpu_custom_call.1} parent=15 // pred_fallthru
          _
      $region16: #{tpu_custom_call.1} parent=5 // pred_fallthru
        _
      %p238 = scmp.le.s32.totalorder 1, %s17
      %p239 = scmp.lt.s32.totalorder %s17, 5
      %p240 = pnand %p238, %p239
      %p241 = pneg %p240
      // Predicated region
      $region25: #{tpu_custom_call.1} parent=5 // pred_check
        _
      $region26: #{tpu_custom_call.1} parent=5 // pred_check_branch
        %243 = sbr.rel (%p240) target = $region28
      $region27: #{tpu_custom_call.1} parent=5 // pred_region
        %s244 = ssub.s32 %s17, 1
        %s245 = sand.u32 %s44, 1
        %s246 = scalar_lea.sflag [#allocation3], %s245
        %s247 = sand.u32 %s44, 1
        %s248 = smul.addr %s247, 32
        %s249 = scalar_lea.vmem [#allocation2], %s248
        // Predicated region
        $region29: #{tpu_custom_call.1} parent=27 // pred_check
          %p250 = pneg %p57
        $region30: #{tpu_custom_call.1} parent=27 // pred_check_branch
          %252 = sbr.rel (%p250) target = $region32
        $region31: #{tpu_custom_call.1} parent=27 // pred_region
          %254 = dma.done %s246, 512
        $region32: #{tpu_custom_call.1} parent=27 // pred_fallthru
          _
        %s255 = sand.u32 %s72, 1
        %s256 = scalar_lea.sflag [#allocation5], %s255
        %s257 = sand.u32 %s72, 1
        %s258 = smul.addr %s257, 32
        %s259 = scalar_lea.vmem [#allocation4], %s258
        // Predicated region
        $region33: #{tpu_custom_call.1} parent=27 // pred_check
          %p260 = pneg %p85
        $region34: #{tpu_custom_call.1} parent=27 // pred_check_branch
          %262 = sbr.rel (%p260) target = $region36
        $region35: #{tpu_custom_call.1} parent=27 // pred_region
          %264 = dma.done %s256, 512
        $region36: #{tpu_custom_call.1} parent=27 // pred_fallthru
          _
        %s265 = sand.u32 %s44, 1
        %s266 = scalar_lea.sflag [#allocation3], %s265
        %s267 = sand.u32 %s44, 1
        %s268 = smul.addr %s267, 32
        %s269 = scalar_lea.vmem [#allocation2], %s268
        %p270 = pneg %p57
        %p271 = pneg %p54
        %s272 = sand.u32 %s72, 1
        %s273 = scalar_lea.sflag [#allocation5], %s272
        %s274 = sand.u32 %s72, 1
        %s275 = smul.addr %s274, 32
        %s276 = scalar_lea.vmem [#allocation4], %s275
        %p277 = pneg %p85
        %p278 = pneg %p82
        %p279 = pneg %p113
        %p280 = pneg %p110
        %p281 = scmp.lt.s32.totalorder %s26, 3
        %s282 = scalar_select %p281, %s26, 3
        %p283 = scmp.lt.s32.totalorder %s27, 0
        %s284 = scalar_select %p283, %s27, 0
        %s285 = sadd.s32 %s284, %s282
        %s286 = smul.addr %s285, 2
        %s287 = scalar_lea.vmem %s2, %s286
        %p288 = pneg %p141
        %p289 = pneg %p138
        %p290 = scmp.lt.s32.totalorder %s26, 3
        %s291 = scalar_select %p290, %s26, 3
        %p292 = scmp.lt.s32.totalorder %s27, 0
        %s293 = scalar_select %p292, %s27, 0
        %s294 = sadd.s32 %s293, %s291
        %s295 = smul.addr %s294, 2
        %s296 = scalar_lea.vmem %s3, %s295
        %p297 = pneg %p169
        %p298 = pneg %p166
        %p299 = scmp.lt.s32.totalorder %s26, 3
        %s300 = scalar_select %p299, %s26, 3
        %p301 = scmp.lt.s32.totalorder %s27, 0
        %s302 = scalar_select %p301, %s27, 0
        %s303 = sadd.s32 %s302, %s300
        %s304 = smul.addr %s303, 2
        %s305 = scalar_lea.vmem %s4, %s304
        %s306 = smul.u32 2, %s26
        %s307 = smul.u32 2, %s27
        %s308 = smul.u32 2, %s26
        %s309 = smul.u32 2, %s27
        %p310 = scmp.lt.s32.totalorder %s26, 3
        %s311 = scalar_select %p310, %s26, 3
        %p312 = scmp.lt.s32.totalorder %s27, 0
        %s313 = scalar_select %p312, %s27, 0
        %s314 = sadd.s32 %s313, %s311
        %s315 = smul.addr %s314, 2
        %s316 = scalar_lea.vmem %s2, %s315
        %p317 = scmp.lt.s32.totalorder %s26, 3
        %s318 = scalar_select %p317, %s26, 3
        %p319 = scmp.lt.s32.totalorder %s27, 0
        %s320 = scalar_select %p319, %s27, 0
        %s321 = sadd.s32 %s320, %s318
        %s322 = smul.addr %s321, 2
        %s323 = scalar_lea.vmem %s3, %s322
        %p324 = scmp.lt.s32.totalorder %s26, 3
        %s325 = scalar_select %p324, %s26, 3
        %p326 = scmp.lt.s32.totalorder %s27, 0
        %s327 = scalar_select %p326, %s27, 0
        %s328 = sadd.s32 %s327, %s325
        %s329 = smul.addr %s328, 2
        %s330 = scalar_lea.vmem %s4, %s329
        %v331 = vld [vmem:[%s249] sm:$0xff]
        %v332 = vld [vmem:[%s249 + $0x8] sm:$0xff]
        %v333 = vld [vmem:[%s249 + $0x10] sm:$0xff]
        %v334 = vld [vmem:[%s249 + $0x18] sm:$0xff]
        %v335 = vld [vmem:[%s259] sm:$0xff]
        %v336 = vld [vmem:[%s259 + $0x8] sm:$0xff]
        %v337 = vld [vmem:[%s259 + $0x10] sm:$0xff]
        %v338 = vld [vmem:[%s259 + $0x18] sm:$0xff]
        %v339 = vand.u32 2147483647, %v331
        %v340 = vand.u32 2147483647, %v332
        %v341 = vand.u32 2147483647, %v333
        %v342 = vand.u32 2147483647, %v334
        %v343 = vsub.f32 0.0, %v339
        %v344 = vsub.f32 0.0, %v340
        %v345 = vsub.f32 0.0, %v341
        %v346 = vsub.f32 0.0, %v342
        %v347 = vmul.f32 %v343, 1.442695
        %v348 = vpow.pop %v347
        %v349 = vmul.f32 %v344, 1.442695
        %v350 = vpow.pop %v349
        %v351 = vmul.f32 %v345, 1.442695
        %v352 = vpow.pop %v351
        %v353 = vmul.f32 %v346, 1.442695
        %v354 = vpow.pop %v353
        %v355 = vmax.f32 %v331, 0.0
        %v356 = vmax.f32 %v332, 0.0
        %v357 = vmax.f32 %v333, 0.0
        %v358 = vmax.f32 %v334, 0.0
        %v359 = vadd.f32 %v348, 1.0
        %v360 = vadd.f32 %v350, 1.0
        %v361 = vadd.f32 %v352, 1.0
        %v362 = vadd.f32 %v354, 1.0
        %v363 = vlog2.pop %v359
        %v364 = vmul.f32 %v363, 0.6931472
        %v365 = vlog2.pop %v360
        %v366 = vmul.f32 %v365, 0.6931472
        %v367 = vlog2.pop %v361
        %v368 = vmul.f32 %v367, 0.6931472
        %v369 = vlog2.pop %v362
        %v370 = vmul.f32 %v369, 0.6931472
        %v371 = vadd.f32 %v355, %v364
        %v372 = vadd.f32 %v356, %v366
        %v373 = vadd.f32 %v357, %v368
        %v374 = vadd.f32 %v358, %v370
        %v375 = vrcp.pop %v359
        %v376 = vmul.f32 %v359, %v375
        %v377 = vsub.f32 1.0, %v376
        %v378 = vmul.f32 %v375, %v377
        %v379 = vadd.f32 %v375, %v378
        %vm380 = vweird.f32 %v359
        %vm381 = vweird.f32 %v375
        %vm382 = vmor %vm380, %vm381
        %v383 = vsel %vm382, %v375, %v379
        %v384 = vand.u32 2147483647, %v359
        %vm385 = vcmp.eq.f32.partialorder %v384, 8.507059e+37
        %v386 = vand.u32 %v359, 2147483648
        %v387 = vor.u32 1.1754944e-38, %v386
        %v388 = vsel %vm385, %v387, %v383
        %v389 = vmul.f32 1.0, %v388
        %v390 = vrcp.pop %v360
        %v391 = vmul.f32 %v360, %v390
        %v392 = vsub.f32 1.0, %v391
        %v393 = vmul.f32 %v390, %v392
        %v394 = vadd.f32 %v390, %v393
        %vm395 = vweird.f32 %v360
        %vm396 = vweird.f32 %v390
        %vm397 = vmor %vm395, %vm396
        %v398 = vsel %vm397, %v390, %v394
        %v399 = vand.u32 2147483647, %v360
        %vm400 = vcmp.eq.f32.partialorder %v399, 8.507059e+37
        %v401 = vand.u32 %v360, 2147483648
        %v402 = vor.u32 1.1754944e-38, %v401
        %v403 = vsel %vm400, %v402, %v398
        %v404 = vmul.f32 1.0, %v403
        %v405 = vrcp.pop %v361
        %v406 = vmul.f32 %v361, %v405
        %v407 = vsub.f32 1.0, %v406
        %v408 = vmul.f32 %v405, %v407
        %v409 = vadd.f32 %v405, %v408
        %vm410 = vweird.f32 %v361
        %vm411 = vweird.f32 %v405
        %vm412 = vmor %vm410, %vm411
        %v413 = vsel %vm412, %v405, %v409
        %v414 = vand.u32 2147483647, %v361
        %vm415 = vcmp.eq.f32.partialorder %v414, 8.507059e+37
        %v416 = vand.u32 %v361, 2147483648
        %v417 = vor.u32 1.1754944e-38, %v416
        %v418 = vsel %vm415, %v417, %v413
        %v419 = vmul.f32 1.0, %v418
        %v420 = vrcp.pop %v362
        %v421 = vmul.f32 %v362, %v420
        %v422 = vsub.f32 1.0, %v421
        %v423 = vmul.f32 %v420, %v422
        %v424 = vadd.f32 %v420, %v423
        %vm425 = vweird.f32 %v362
        %vm426 = vweird.f32 %v420
        %vm427 = vmor %vm425, %vm426
        %v428 = vsel %vm427, %v420, %v424
        %v429 = vand.u32 2147483647, %v362
        %vm430 = vcmp.eq.f32.partialorder %v429, 8.507059e+37
        %v431 = vand.u32 %v362, 2147483648
        %v432 = vor.u32 1.1754944e-38, %v431
        %v433 = vsel %vm430, %v432, %v428
        %v434 = vmul.f32 1.0, %v433
        %vm435 = vcmp.ge.f32.partialorder %v331, 0.0
        %vm436 = vcmp.ge.f32.partialorder %v332, 0.0
        %vm437 = vcmp.ge.f32.partialorder %v333, 0.0
        %vm438 = vcmp.ge.f32.partialorder %v334, 0.0
        %v439 = vmul.f32 %v348, %v389
        %v440 = vmul.f32 %v350, %v404
        %v441 = vmul.f32 %v352, %v419
        %v442 = vmul.f32 %v354, %v434
        %v443 = vsel %vm435, %v389, %v439
        %v444 = vsel %vm436, %v404, %v440
        %v445 = vsel %vm437, %v419, %v441
        %v446 = vsel %vm438, %v434, %v442
        %v447 = vsub.f32 %v331, %v371
        %v448 = vsub.f32 %v332, %v372
        %v449 = vsub.f32 %v333, %v373
        %v450 = vsub.f32 %v334, %v374
        %v451 = vmax.f32 %v447, -100.0
        %v452 = vmax.f32 %v448, -100.0
        %v453 = vmax.f32 %v449, -100.0
        %v454 = vmax.f32 %v450, -100.0
        %vm455 = vcmp.ge.f32.partialorder %v331, 17.32868
        %vm456 = vcmp.ge.f32.partialorder %v332, 17.32868
        %vm457 = vcmp.ge.f32.partialorder %v333, 17.32868
        %vm458 = vcmp.ge.f32.partialorder %v334, 17.32868
        %v459 = vsub.f32 0.0, %v371
        %v460 = vsub.f32 0.0, %v372
        %v461 = vsub.f32 0.0, %v373
        %v462 = vsub.f32 0.0, %v374
        %v463 = vsel %vm455, -100.0, %v459
        %v464 = vsel %vm456, -100.0, %v460
        %v465 = vsel %vm457, -100.0, %v461
        %v466 = vsel %vm458, -100.0, %v462
        %v467 = vsub.f32 %v451, %v463
        %v468 = vsub.f32 %v452, %v464
        %v469 = vsub.f32 %v453, %v465
        %v470 = vsub.f32 %v454, %v466
        %v471 = vmul.f32 %v335, %v467
        %v472 = vmul.f32 %v336, %v468
        %v473 = vmul.f32 %v337, %v469
        %v474 = vmul.f32 %v338, %v470
        %v475 = vadd.f32 %v463, %v471
        %v476 = vadd.f32 %v464, %v472
        %v477 = vadd.f32 %v465, %v473
        %v478 = vadd.f32 %v466, %v474
        %v479 = vsub.f32 0.0, %v475
        %v480 = vsub.f32 0.0, %v476
        %v481 = vsub.f32 0.0, %v477
        %v482 = vsub.f32 0.0, %v478
        %vm483 = vcmask 130048
        %v484 = vsel %vm483, %v479, 0.0
        %485 = vadd.xlane.f32.xlu0 %v484
        %v486 = vpop.xlane.xlu0 %485
        %v487 = vsel %vm483, %v480, 0.0
        %488 = vadd.xlane.f32.xlu0 %v487
        %v489 = vpop.xlane.xlu0 %488
        %v490 = vsel %vm483, %v481, 0.0
        %491 = vadd.xlane.f32.xlu0 %v490
        %v492 = vpop.xlane.xlu0 %491
        %v493 = vsel %vm483, %v482, 0.0
        %494 = vadd.xlane.f32.xlu0 %v493
        %v495 = vpop.xlane.xlu0 %494
        %v500 = vlaneseq
        %v501 = vand.u32 %v500, 127
        %v502 = vperm.slane %v486, %v501
        %v503 = vadd.s32 %v501, 4294967288
        %v504 = vperm.slane %v489, %v503
        %vm505 = vcmask 130112
        %v506 = vsel %vm505, %v504, %v502
        %v507 = vperm.slane %v492, %v501
        %v508 = vperm.slane %v495, %v503
        %v509 = vsel %vm505, %v508, %v507
        %vm510 = vcmask 1041409
        %v511 = vsel %vm510, %v509, %v506
        %vm513 = vcmask 123904
        %v514 = vsel %vm513, %v511, 0.0
        %515 = vadd.xlane.f32.xlu0 %v514
        %v516 = vpop.xlane.xlu0 %515
        %vm517 = vcmask 1024
        %518 = vst.msk [vmem:[%s316] sm:$0x3] %vm517, %v516
        %v519 = vadd.f32 %v443, %v335
        %v520 = vadd.f32 %v444, %v336
        %v521 = vadd.f32 %v445, %v337
        %v522 = vadd.f32 %v446, %v338
        %v523 = vsel %vm483, %v519, 0.0
        %524 = vadd.xlane.f32.xlu0 %v523
        %v525 = vpop.xlane.xlu0 %524
        %v526 = vsel %vm483, %v520, 0.0
        %527 = vadd.xlane.f32.xlu0 %v526
        %v528 = vpop.xlane.xlu0 %527
        %v529 = vsel %vm483, %v521, 0.0
        %530 = vadd.xlane.f32.xlu0 %v529
        %v531 = vpop.xlane.xlu0 %530
        %v532 = vsel %vm483, %v522, 0.0
        %533 = vadd.xlane.f32.xlu0 %v532
        %v534 = vpop.xlane.xlu0 %533
        %v539 = vperm.slane %v525, %v501
        %v540 = vperm.slane %v528, %v503
        %v541 = vsel %vm505, %v540, %v539
        %v542 = vperm.slane %v531, %v501
        %v543 = vperm.slane %v534, %v503
        %v544 = vsel %vm505, %v543, %v542
        %v545 = vsel %vm510, %v544, %v541
        %v547 = vsel %vm513, %v545, 0.0
        %548 = vadd.xlane.f32.xlu0 %v547
        %v549 = vpop.xlane.xlu0 %548
        %550 = vst.msk [vmem:[%s323] sm:$0x3] %vm517, %v549
        %v551 = vmul.f32 %v443, %v335
        %v552 = vmul.f32 %v444, %v336
        %v553 = vmul.f32 %v445, %v337
        %v554 = vmul.f32 %v446, %v338
        %v555 = vsel %vm483, %v551, 0.0
        %556 = vadd.xlane.f32.xlu0 %v555
        %v557 = vpop.xlane.xlu0 %556
        %v558 = vsel %vm483, %v552, 0.0
        %559 = vadd.xlane.f32.xlu0 %v558
        %v560 = vpop.xlane.xlu0 %559
        %v561 = vsel %vm483, %v553, 0.0
        %562 = vadd.xlane.f32.xlu0 %v561
        %v563 = vpop.xlane.xlu0 %562
        %v564 = vsel %vm483, %v554, 0.0
        %565 = vadd.xlane.f32.xlu0 %v564
        %v566 = vpop.xlane.xlu0 %565
        %v571 = vperm.slane %v557, %v501
        %v572 = vperm.slane %v560, %v503
        %v573 = vsel %vm505, %v572, %v571
        %v574 = vperm.slane %v563, %v501
        %v575 = vperm.slane %v566, %v503
        %v576 = vsel %vm505, %v575, %v574
        %v577 = vsel %vm510, %v576, %v573
        %v579 = vsel %vm513, %v577, 0.0
        %580 = vadd.xlane.f32.xlu0 %v579
        %v581 = vpop.xlane.xlu0 %580
        %582 = vst.msk [vmem:[%s330] sm:$0x3] %vm517, %v581
        %p583 = scmp.lt.s32.totalorder %s26, 3
        %s584 = scalar_select %p583, %s26, 3
        %p585 = scmp.lt.s32.totalorder %s27, 0
        %s586 = scalar_select %p585, %s27, 0
        %s587 = sadd.s32 %s586, %s584
        %s588 = smul.addr %s587, 2
        %s589 = scalar_lea.vmem %s2, %s588
        %p590 = scmp.lt.s32.totalorder %s26, 3
        %s591 = scalar_select %p590, %s26, 3
        %p592 = scmp.lt.s32.totalorder %s27, 0
        %s593 = scalar_select %p592, %s27, 0
        %s594 = sadd.s32 %s593, %s591
        %s595 = smul.addr %s594, 2
        %s596 = scalar_lea.vmem %s3, %s595
        %p597 = scmp.lt.s32.totalorder %s26, 3
        %s598 = scalar_select %p597, %s26, 3
        %p599 = scmp.lt.s32.totalorder %s27, 0
        %s600 = scalar_select %p599, %s27, 0
        %s601 = sadd.s32 %s600, %s598
        %s602 = smul.addr %s601, 2
        %s603 = scalar_lea.vmem %s4, %s602
        // Predicated region
        $region37: #{tpu_custom_call.1} parent=27 // pred_check
          %p604 = pneg %p110
        $region38: #{tpu_custom_call.1} parent=27 // pred_check_branch
          %606 = sbr.rel (%p604) target = $region40
        $region39: #{tpu_custom_call.1} parent=27 // pred_region
          _
        $region40: #{tpu_custom_call.1} parent=27 // pred_fallthru
          _
        // Predicated region
        $region41: #{tpu_custom_call.1} parent=27 // pred_check
          %p607 = pneg %p138
        $region42: #{tpu_custom_call.1} parent=27 // pred_check_branch
          %609 = sbr.rel (%p607) target = $region44
        $region43: #{tpu_custom_call.1} parent=27 // pred_region
          _
        $region44: #{tpu_custom_call.1} parent=27 // pred_fallthru
          _
        // Predicated region
        $region45: #{tpu_custom_call.1} parent=27 // pred_check
          %p610 = pneg %p166
        $region46: #{tpu_custom_call.1} parent=27 // pred_check_branch
          %612 = sbr.rel (%p610) target = $region48
        $region47: #{tpu_custom_call.1} parent=27 // pred_region
          _
        $region48: #{tpu_custom_call.1} parent=27 // pred_fallthru
          _
      $region28: #{tpu_custom_call.1} parent=5 // pred_fallthru
        _
      %p613 = scmp.le.s32.totalorder 2, %s17
      // Predicated region
      $region49: #{tpu_custom_call.1} parent=5 // pred_check
        %p614 = pneg %p613
      $region50: #{tpu_custom_call.1} parent=5 // pred_check_branch
        %616 = sbr.rel (%p614) target = $region52
      $region51: #{tpu_custom_call.1} parent=5 // pred_region
        %s617 = ssub.s32 %s17, 2
        // Predicated region
        $region53: #{tpu_custom_call.1} parent=51 // pred_check
          %p618 = pneg %p116
        $region54: #{tpu_custom_call.1} parent=51 // pred_check_branch
          %620 = sbr.rel (%p618) target = $region56
        $region55: #{tpu_custom_call.1} parent=51 // pred_region
          %p621 = scmp.lt.s32.totalorder %s28, 3
          %s622 = scalar_select %p621, %s28, 3
          %p623 = scmp.lt.s32.totalorder %s29, 0
          %s624 = scalar_select %p623, %s29, 0
          %s625 = sadd.s32 %s624, %s622
          %s626 = smul.addr %s625, 2
          %s627 = scalar_lea.vmem %s2, %s626
        $region56: #{tpu_custom_call.1} parent=51 // pred_fallthru
          _
        // Predicated region
        $region57: #{tpu_custom_call.1} parent=51 // pred_check
          %p628 = pneg %p144
        $region58: #{tpu_custom_call.1} parent=51 // pred_check_branch
          %630 = sbr.rel (%p628) target = $region60
        $region59: #{tpu_custom_call.1} parent=51 // pred_region
          %p631 = scmp.lt.s32.totalorder %s28, 3
          %s632 = scalar_select %p631, %s28, 3
          %p633 = scmp.lt.s32.totalorder %s29, 0
          %s634 = scalar_select %p633, %s29, 0
          %s635 = sadd.s32 %s634, %s632
          %s636 = smul.addr %s635, 2
          %s637 = scalar_lea.vmem %s3, %s636
        $region60: #{tpu_custom_call.1} parent=51 // pred_fallthru
          _
        // Predicated region
        $region61: #{tpu_custom_call.1} parent=51 // pred_check
          %p638 = pneg %p172
        $region62: #{tpu_custom_call.1} parent=51 // pred_check_branch
          %640 = sbr.rel (%p638) target = $region64
        $region63: #{tpu_custom_call.1} parent=51 // pred_region
          %p641 = scmp.lt.s32.totalorder %s28, 3
          %s642 = scalar_select %p641, %s28, 3
          %p643 = scmp.lt.s32.totalorder %s29, 0
          %s644 = scalar_select %p643, %s29, 0
          %s645 = sadd.s32 %s644, %s642
          %s646 = smul.addr %s645, 2
          %s647 = scalar_lea.vmem %s4, %s646
        $region64: #{tpu_custom_call.1} parent=51 // pred_fallthru
          _
      $region52: #{tpu_custom_call.1} parent=5 // pred_fallthru
        _
    $region6: #{tpu_custom_call.1} parent=1 // loop_footer
      %s21 = sadd.s32 1, %s17
    $region7: #{tpu_custom_call.1} parent=1 // loop_footer_branch
      %16 = sbr.rel target = $region3
    $region8: #{tpu_custom_call.1} parent=1 // loop_exit
      _
    %648 = vsyncpa [#allocation3], 1
    %s649 = scalar_lea.sflag [#allocation3], 1
    %650 = vsyncpa %s649, 1
    %651 = vsyncpa [#allocation5], 1
    %s652 = scalar_lea.sflag [#allocation5], 1
    %653 = vsyncpa %s652, 1

</llo_original>
